<compile_context>
chip_gen: v7x
topology: tpu7x:2x2x1
jax: 0.10.0
libtpu: 0.0.40
codegen_flags: <defaults>
</compile_context>

<pallas_src>
from functools import partial

import jax
import jax.numpy as jnp
from jax.experimental import pallas as pl
from jax.experimental.pallas import tpu as pltpu

LEAKY_SLOPE = 0.1
BN_EPS = 1e-5
HALO_BLOCK = 128          # lane-aligned halo fetch width (only K-1 cols used)


# ------------------------------- kernel ------------------------------------ #
def _upsampling_kernel(x_ref, h_ref, w_ref, b_ref, o_ref):
    """One grid step == (batch element b, output L-tile t).

    x_ref: (1, C_in, L_TILE)   f32  bulk input, padded cols [t*L_TILE, (t+1)*L_TILE)
    h_ref: (1, C_in, 128)      f32  halo: next 128 padded cols (first K-1 used)
    w_ref: (K, C_out, C_in)    bf16 BN-folded weight, w[k,o,c] = w_conv[o,c,k]*scale[o]
    b_ref: (C_out, 1)          f32  BN-folded bias
    o_ref: (1, C_out, L_TILE)  output (bf16 by default), lane-dense
    """
    k_taps, c_out, _ = w_ref.shape
    l_tile = o_ref.shape[2]

    # Cast to bf16 in VMEM (rides in spare VPU slots; f32 stays in HBM).
    xb = x_ref[0].astype(jnp.bfloat16)                      # (C_in, L_TILE)
    xh = h_ref[0, :, : k_taps - 1].astype(jnp.bfloat16)     # (C_in, K-1)
    xw = jnp.concatenate([xb, xh], axis=-1)                 # (C_in, L_TILE+K-1)

    wk = w_ref[...]                                         # (K, C_out, C_in)
    acc = jnp.zeros((c_out, l_tile), jnp.float32)
    for k in range(k_taps):                                 # unrolled, K tiny
        acc = acc + jnp.dot(wk[k], xw[:, k:k + l_tile],
                            preferred_element_type=jnp.float32)

    y = acc + b_ref[...]                                    # f32 epilogue
    o_ref[0] = jnp.where(y >= 0, y, LEAKY_SLOPE * y).astype(o_ref.dtype)


# ------------------------------- wrapper ------------------------------------ #
@partial(jax.jit, static_argnames=("padding", "l_tile", "out_dtype"))
def upsampling_layer(x, w, b, gamma, beta, mean, var, *,
                     padding=2, l_tile=512, out_dtype=jnp.bfloat16):
    """x: (B, C_in, L) NCL f32.  w: (C_out, C_in, K) (PyTorch layout).
    Returns (B, C_out, L_out) with L_out = L + 2*pad - K + 1."""
    B, C_in, L = x.shape
    C_out, _, K = w.shape
    assert K - 1 <= HALO_BLOCK
    L_out = L + 2 * padding - K + 1

    # ---- fold BatchNorm (eval) + conv bias into the conv weight (host, tiny).
    scale = gamma * jax.lax.rsqrt(var + BN_EPS)                      # (C_out,)
    wk = jnp.transpose(w * scale[:, None, None], (2, 0, 1))          # (K, C_out, C_in)
    wk = wk.astype(jnp.bfloat16)
    b_col = ((b - mean) * scale + beta).reshape(C_out, 1).astype(jnp.float32)

    # ---- L tiling: multiple of 128 so output stores are unmasked/lane-dense.
    l_tile = max(HALO_BLOCK, min(l_tile, pl.cdiv(L_out, HALO_BLOCK) * HALO_BLOCK))
    assert l_tile % HALO_BLOCK == 0
    n_t = pl.cdiv(L_out, l_tile)
    L_out_p = n_t * l_tile
    halo_blocks_per_tile = l_tile // HALO_BLOCK

    # ---- zero-pad only along L (conv pad + room for the trailing halo block);
    # channels stay at C_in and dtype stays f32 (bf16 cast happens in VMEM).
    pad_r = L_out_p + HALO_BLOCK - padding - L
    xp = jnp.pad(x, ((0, 0), (0, 0), (padding, pad_r)))      # (B, C_in, L_out_p+128)

    cost = pl.CostEstimate(
        flops=int(2 * B * L_out * K * C_in * C_out),
        transcendentals=0,
        bytes_accessed=int(xp.size * 4
                           + B * n_t * C_in * HALO_BLOCK * 4      # halo re-reads
                           + wk.size * 2 + b_col.size * 4
                           + B * C_out * L_out_p * jnp.dtype(out_dtype).itemsize),
    )

    out = pl.pallas_call(
        _upsampling_kernel,
        out_shape=jax.ShapeDtypeStruct((B, C_out, L_out_p), out_dtype),
        grid=(B, n_t),
        in_specs=[
            # bulk window of this tile
            pl.BlockSpec((1, C_in, l_tile), lambda bi, ti: (bi, 0, ti)),
            # 128-wide halo: the next 128 padded columns of the same array
            pl.BlockSpec((1, C_in, HALO_BLOCK),
                         lambda bi, ti: (bi, 0, (ti + 1) * halo_blocks_per_tile)),
            pl.BlockSpec((K, C_out, C_in), lambda bi, ti: (0, 0, 0)),
            pl.BlockSpec((C_out, 1), lambda bi, ti: (0, 0)),
        ],
        out_specs=pl.BlockSpec((1, C_out, l_tile), lambda bi, ti: (bi, 0, ti)),
        compiler_params=pltpu.CompilerParams(
            dimension_semantics=("parallel", "parallel"),
            vmem_limit_bytes=32 * 1024 * 1024,   # small tiles; safe on v7x (64 MiB phys)
        ),
        cost_estimate=cost,
    )(xp, xp, wk, b_col)                         # same padded input: bulk + halo views

    return out if L_out_p == L_out else out[..., :L_out]


# ------------------------------ reference ----------------------------------- #
def ref_forward(x, w, b, gamma, beta, mean, var, *, padding=2):
    """Pure-JAX f32 reference (same eval-mode BN semantics)."""
    y = jax.lax.conv_general_dilated(
        x, w, window_strides=(1,), padding=[(padding, padding)],
        dimension_numbers=("NCW", "OIW", "NCW"))
    y = y + b[None, :, None]
    y = (y - mean[None, :, None]) * jax.lax.rsqrt(var[None, :, None] + BN_EPS) \
        * gamma[None, :, None] + beta[None, :, None]
    return jnp.where(y >= 0, y, LEAKY_SLOPE * y)


# --------------------------------- main -------------------------------------- #
if __name__ == "__main__":
    key = jax.random.PRNGKey(0)
    B, C_in, C_out, L = 2, 4, 8, 1024
    K, PAD = 5, 2

    kx, kw, kb, kg, kbe, km, kv = jax.random.split(key, 7)
    x = jax.random.normal(kx, (B, C_in, L), jnp.float32)
    w = jax.random.normal(kw, (C_out, C_in, K), jnp.float32) / jnp.sqrt(C_in * K)
    b = 0.1 * jax.random.normal(kb, (C_out,), jnp.float32)
    gamma = 1.0 + 0.1 * jax.random.normal(kg, (C_out,), jnp.float32)
    beta = 0.1 * jax.random.normal(kbe, (C_out,), jnp.float32)
    mean = 0.1 * jax.random.normal(km, (C_out,), jnp.float32)
    var = 1.0 + 0.1 * jax.random.uniform(kv, (C_out,), jnp.float32)

    out = upsampling_layer(x, w, b, gamma, beta, mean, var,
                           padding=PAD, l_tile=512)
    out = jax.block_until_ready(out)
    assert out.shape == (B, C_out, L)

    ref = ref_forward(x, w, b, gamma, beta, mean, var, padding=PAD)
    out_f32 = out.astype(jnp.float32)
    # bf16 matmul inputs + bf16 output vs. a pure-f32 reference: per-element
    # abs+rel check (the relative term catches slope/scale-class bugs that a
    # loose abs-only tolerance could mask).
    atol, rtol = 1e-1, 2.5e-2
    excess = jnp.abs(out_f32 - ref) - (atol + rtol * jnp.abs(ref))
    worst = float(jnp.max(excess))
    if worst > 0:
        raise AssertionError(f"mismatch vs reference: worst excess {worst}")
    print("KERNEL_OK")
</pallas_src>

<mosaic_0001>
module attributes {stable_mosaic.version = 11 : i64} {
  func.func @_upsampling_kernel(%arg0: i32, %arg1: i32, %arg2: memref<1x4x512xf32, #tpu.memory_space<vmem>>, %arg3: memref<1x4x128xf32, #tpu.memory_space<vmem>>, %arg4: memref<5x8x4xbf16, #tpu.memory_space<vmem>>, %arg5: memref<8x1xf32, #tpu.memory_space<vmem>>, %arg6: memref<1x8x512xbf16, #tpu.memory_space<vmem>>) attributes {dimension_semantics = [#tpu.dimension_semantics<parallel>, #tpu.dimension_semantics<parallel>], iteration_bounds = array<i64: 2, 2>, scalar_prefetch = 0 : i64, scratch_operands = 0 : i64, tpu.core_type = #tpu.core_type<tc>, window_params = [{transform_indices = @transform_0, window_bounds = array<i64: 1, 4, 512>}, {transform_indices = @transform_1, window_bounds = array<i64: 1, 4, 128>}, {pipeline_mode = #tpu.pipeline_mode<synchronous>, transform_indices = @transform_2, window_bounds = array<i64: 5, 8, 4>}, {pipeline_mode = #tpu.pipeline_mode<synchronous>, transform_indices = @transform_3, window_bounds = array<i64: 8, 1>}, {transform_indices = @transform_4, window_bounds = array<i64: 1, 8, 512>}]} {
    %c0 = arith.constant 0 : index
    %c0_0 = arith.constant 0 : index
    %c0_1 = arith.constant 0 : index
    %0 = vector.load %arg2[%c0, %c0_0, %c0_1] : memref<1x4x512xf32, #tpu.memory_space<vmem>>, vector<1x4x512xf32>
    %1 = vector.shape_cast %0 : vector<1x4x512xf32> to vector<4x512xf32>
    %2 = arith.truncf %1 : vector<4x512xf32> to vector<4x512xbf16>
    %c0_2 = arith.constant 0 : index
    %c0_3 = arith.constant 0 : index
    %c0_4 = arith.constant 0 : index
    %3 = vector.load %arg3[%c0_2, %c0_3, %c0_4] : memref<1x4x128xf32, #tpu.memory_space<vmem>>, vector<1x4x4xf32>
    %4 = vector.shape_cast %3 : vector<1x4x4xf32> to vector<4x4xf32>
    %5 = arith.truncf %4 : vector<4x4xf32> to vector<4x4xbf16>
    %6 = tpu.concatenate %2, %5 in 1 : vector<4x512xbf16>, vector<4x4xbf16> -> vector<4x516xbf16>
    %c0_5 = arith.constant 0 : index
    %c0_6 = arith.constant 0 : index
    %c0_7 = arith.constant 0 : index
    %7 = vector.load %arg4[%c0_5, %c0_6, %c0_7] : memref<5x8x4xbf16, #tpu.memory_space<vmem>>, vector<5x8x4xbf16>
    %cst = arith.constant 0.000000e+00 : f32
    %8 = vector.broadcast %cst : f32 to vector<8x512xf32>
    %9 = vector.extract_strided_slice %7 {offsets = [0, 0, 0], sizes = [1, 8, 4], strides = [1, 1, 1]} : vector<5x8x4xbf16> to vector<1x8x4xbf16>
    %10 = vector.shape_cast %9 : vector<1x8x4xbf16> to vector<8x4xbf16>
    %11 = vector.extract_strided_slice %6 {offsets = [0, 0], sizes = [4, 512], strides = [1, 1]} : vector<4x516xbf16> to vector<4x512xbf16>
    %cst_8 = arith.constant dense<0.000000e+00> : vector<8x512xf32>
    %12 = tpu.matmul %10, %11, %cst_8 {dimension_numbers = #tpu.dot_dimension_numbers<[1], [0], [0], [1], [0, 0, 1, 1], [], []>} : vector<8x4xbf16>, vector<4x512xbf16>, vector<8x512xf32> -> vector<8x512xf32>
    %13 = arith.addf %8, %12 : vector<8x512xf32>
    %14 = vector.extract_strided_slice %7 {offsets = [1, 0, 0], sizes = [1, 8, 4], strides = [1, 1, 1]} : vector<5x8x4xbf16> to vector<1x8x4xbf16>
    %15 = vector.shape_cast %14 : vector<1x8x4xbf16> to vector<8x4xbf16>
    %16 = vector.extract_strided_slice %6 {offsets = [0, 1], sizes = [4, 512], strides = [1, 1]} : vector<4x516xbf16> to vector<4x512xbf16>
    %cst_9 = arith.constant dense<0.000000e+00> : vector<8x512xf32>
    %17 = tpu.matmul %15, %16, %cst_9 {dimension_numbers = #tpu.dot_dimension_numbers<[1], [0], [0], [1], [0, 0, 1, 1], [], []>} : vector<8x4xbf16>, vector<4x512xbf16>, vector<8x512xf32> -> vector<8x512xf32>
    %18 = arith.addf %13, %17 : vector<8x512xf32>
    %19 = vector.extract_strided_slice %7 {offsets = [2, 0, 0], sizes = [1, 8, 4], strides = [1, 1, 1]} : vector<5x8x4xbf16> to vector<1x8x4xbf16>
    %20 = vector.shape_cast %19 : vector<1x8x4xbf16> to vector<8x4xbf16>
    %21 = vector.extract_strided_slice %6 {offsets = [0, 2], sizes = [4, 512], strides = [1, 1]} : vector<4x516xbf16> to vector<4x512xbf16>
    %cst_10 = arith.constant dense<0.000000e+00> : vector<8x512xf32>
    %22 = tpu.matmul %20, %21, %cst_10 {dimension_numbers = #tpu.dot_dimension_numbers<[1], [0], [0], [1], [0, 0, 1, 1], [], []>} : vector<8x4xbf16>, vector<4x512xbf16>, vector<8x512xf32> -> vector<8x512xf32>
    %23 = arith.addf %18, %22 : vector<8x512xf32>
    %24 = vector.extract_strided_slice %7 {offsets = [3, 0, 0], sizes = [1, 8, 4], strides = [1, 1, 1]} : vector<5x8x4xbf16> to vector<1x8x4xbf16>
    %25 = vector.shape_cast %24 : vector<1x8x4xbf16> to vector<8x4xbf16>
    %26 = vector.extract_strided_slice %6 {offsets = [0, 3], sizes = [4, 512], strides = [1, 1]} : vector<4x516xbf16> to vector<4x512xbf16>
    %cst_11 = arith.constant dense<0.000000e+00> : vector<8x512xf32>
    %27 = tpu.matmul %25, %26, %cst_11 {dimension_numbers = #tpu.dot_dimension_numbers<[1], [0], [0], [1], [0, 0, 1, 1], [], []>} : vector<8x4xbf16>, vector<4x512xbf16>, vector<8x512xf32> -> vector<8x512xf32>
    %28 = arith.addf %23, %27 : vector<8x512xf32>
    %29 = vector.extract_strided_slice %7 {offsets = [4, 0, 0], sizes = [1, 8, 4], strides = [1, 1, 1]} : vector<5x8x4xbf16> to vector<1x8x4xbf16>
    %30 = vector.shape_cast %29 : vector<1x8x4xbf16> to vector<8x4xbf16>
    %31 = vector.extract_strided_slice %6 {offsets = [0, 4], sizes = [4, 512], strides = [1, 1]} : vector<4x516xbf16> to vector<4x512xbf16>
    %cst_12 = arith.constant dense<0.000000e+00> : vector<8x512xf32>
    %32 = tpu.matmul %30, %31, %cst_12 {dimension_numbers = #tpu.dot_dimension_numbers<[1], [0], [0], [1], [0, 0, 1, 1], [], []>} : vector<8x4xbf16>, vector<4x512xbf16>, vector<8x512xf32> -> vector<8x512xf32>
    %33 = arith.addf %28, %32 : vector<8x512xf32>
    %c0_13 = arith.constant 0 : index
    %c0_14 = arith.constant 0 : index
    %34 = vector.load %arg5[%c0_13, %c0_14] : memref<8x1xf32, #tpu.memory_space<vmem>>, vector<8x1xf32>
    %35 = vector.broadcast %34 : vector<8x1xf32> to vector<8x512xf32>
    %36 = arith.addf %33, %35 : vector<8x512xf32>
    %cst_15 = arith.constant 0.000000e+00 : f32
    %37 = vector.broadcast %cst_15 : f32 to vector<8x512xf32>
    %38 = arith.cmpf oge, %36, %37 : vector<8x512xf32>
    %cst_16 = arith.constant 1.000000e-01 : f32
    %39 = vector.broadcast %cst_16 : f32 to vector<8x512xf32>
    %40 = arith.mulf %39, %36 : vector<8x512xf32>
    %41 = arith.select %38, %36, %40 : vector<8x512xi1>, vector<8x512xf32>
    %42 = arith.truncf %41 : vector<8x512xf32> to vector<8x512xbf16>
    %c0_17 = arith.constant 0 : index
    %c0_18 = arith.constant 0 : index
    %c0_19 = arith.constant 0 : index
    %43 = vector.load %arg6[%c0_17, %c0_18, %c0_19] : memref<1x8x512xbf16, #tpu.memory_space<vmem>>, vector<1x8x512xbf16>
    %44 = vector.shape_cast %43 : vector<1x8x512xbf16> to vector<8x512xbf16>
    %45 = vector.shape_cast %42 : vector<8x512xbf16> to vector<1x8x512xbf16>
    tpu.vector_store %arg6[%c0_17, %c0_18, %c0_19], %45 {strides = array<i32>} : memref<1x8x512xbf16, #tpu.memory_space<vmem>>, vector<1x8x512xbf16>,
    return
  }
  func.func @transform_0(%arg0: i32, %arg1: i32) -> (i32, i32, i32) {
    %c0_i32 = arith.constant 0 : i32
    %c0_i32_0 = arith.constant 0 : i32
    return %arg0, %c0_i32, %arg1 : i32, i32, i32
  }
  func.func @transform_1(%arg0: i32, %arg1: i32) -> (i32, i32, i32) {
    %c1_i32 = arith.constant 1 : i32
    %0 = arith.addi %arg1, %c1_i32 : i32
    %c4_i32 = arith.constant 4 : i32
    %1 = arith.muli %0, %c4_i32 : i32
    %c0_i32 = arith.constant 0 : i32
    %c0_i32_0 = arith.constant 0 : i32
    return %arg0, %c0_i32, %1 : i32, i32, i32
  }
  func.func @transform_2(%arg0: i32, %arg1: i32) -> (i32, i32, i32) {
    %c0_i32 = arith.constant 0 : i32
    %c0_i32_0 = arith.constant 0 : i32
    %c0_i32_1 = arith.constant 0 : i32
    %c0_i32_2 = arith.constant 0 : i32
    return %c0_i32, %c0_i32_0, %c0_i32_1 : i32, i32, i32
  }
  func.func @transform_3(%arg0: i32, %arg1: i32) -> (i32, i32) {
    %c0_i32 = arith.constant 0 : i32
    %c0_i32_0 = arith.constant 0 : i32
    %c0_i32_1 = arith.constant 0 : i32
    return %c0_i32, %c0_i32_0 : i32, i32
  }
  func.func @transform_4(%arg0: i32, %arg1: i32) -> (i32, i32, i32) {
    %c0_i32 = arith.constant 0 : i32
    %c0_i32_0 = arith.constant 0 : i32
    return %arg0, %c0_i32, %arg1 : i32, i32, i32
  }
}

</mosaic_0001>

<llo_original>
// kernel: upsampling_layer.1
$region0: #{upsampling_layer.1}
  #allocation0 [shape = 'u32[]', space=smem, size = 0x4, offset = 0x4, fixed_abs, tag = 'smem constant byte address 0x4 - core index']
  #allocation1 [shape = 'u32[144,128]{1,0:T(1,128)}', space=vmem, size = 0x12000, scoped, tag = 'internal scratch']
  %s0 = inlined_call_operand.vmem [shape: f32[2,4,1152], index: 0, kind: input, shape index: {}, may-alias: {0,1}]
  %s1 = inlined_call_operand.vmem [shape: f32[2,4,1152], index: 1, kind: input, shape index: {}, may-alias: {0,1}]
  %s2 = inlined_call_operand.vmem [shape: bf16[5,8,4], index: 2, kind: input, shape index: {}]
  %s3 = inlined_call_operand.vmem [shape: f32[8,1], index: 3, kind: input, shape index: {}]
  %s4 = inlined_call_operand.hbm [shape: bf16[2,8,1024], index: 4, kind: output, shape index: {}]
  %s5 = sld [smem:[#allocation0]]
  $region49: #{upsampling_layer.1} parent=0
    _
  %s7 = ssub.s32 1, %s5
  %s8 = scalar_select 0, %s7, %s5
  $region1: #{upsampling_layer.1} parent=0
    #allocation2 [shape = 'u8[16384]{0}', space=vmem, size = 0x4000, scoped, tag = 'output window, operand 0']
    #allocation3 [shape = 's32[2]{0}', space=sflag, size = 0x8, scoped, tag = 'scoped memory for upsampling_layer.1']
    %9 = vsyncpa [#allocation3], 0
    %s10 = scalar_lea.sflag [#allocation3], 1
    %11 = vsyncpa %s10, 0
    loop: start=0, step=1, limit=6
    $region2: #{upsampling_layer.1} parent=1 // loop_pre_header
      _
    $region3: #{upsampling_layer.1} parent=1 // loop_header
      %s13 = sphi 0, %s17
      %p14 = scmp.ge.s32.totalorder %s13, 6
      %s20 = sphi 0, %s32
      %s21 = sphi 0, %s28
      %s22 = sphi 0, %s20
      %s23 = sphi 0, %s21
      %s24 = sphi 0, %s22
      %s25 = sphi 0, %s23
      %s37 = sphi 0, %s39
      %s40 = sphi 0, %s37
      %s41 = sphi 0, %s40
      %s57 = sphi 0, %s41
      %s69 = sphi 0, %s71
      %s72 = sphi 0, %s69
      %s73 = sphi 0, %s72
      %s89 = sphi 0, %s73
      %s93 = sphi 0, %s93
      %s95 = sphi 0, %s93
      %s96 = sphi 0, %s95
      %s110 = sphi 0, %s96
      %s114 = sphi 0, %s114
      %s116 = sphi 0, %s114
      %s117 = sphi 0, %s116
      %s131 = sphi 0, %s117
      %s139 = sphi 0, %s141
      %s142 = sphi 0, %s139
      %s143 = sphi 0, %s142
      %s159 = sphi 0, %s143
    $region4: #{upsampling_layer.1} parent=1 // loop_header_branch
      %16 = sbr.rel (%p14) target = $region8
    $region5: #{upsampling_layer.1} parent=1 // loop_body
      %s18 = ssub.s32 %s13, 1
      %s19 = ssub.s32 %s13, 2
      %s26 = sadd.s32 1, %s21
      %p27 = scmp.ge.s32.totalorder %s26, 2
      %s28 = scalar_select %p27, 0, %s26
      %s29 = sadd.s32 1, %s20
      %s30 = scalar_select %p27, %s29, %s20
      %p31 = scmp.ge.s32.totalorder %s30, 2
      %s32 = scalar_select %p31, 0, %s30
      %s33 = ssub.s32 %s20, %s32
      %s34 = ssub.s32 %s21, %s28
      %s35 = sor.u32 %s33, %s34
      %p36 = scmp.eq.s32.totalorder %s35, 0
      %s38 = sadd.s32 %s37, 1
      %s39 = scalar_select %p36, %s37, %s38
      %p42 = pneg %p36
      %p43 = scmp.eq.s32.totalorder %s13, 3
      %p44 = por %p42, %p43
      %p45 = scmp.ne.s32.totalorder %s37, %s40
      %p46 = scmp.eq.s32.totalorder %s13, 0
      %p47 = por %p45, %p46
      %p48 = scmp.ne.s32.totalorder %s37, %s40
      %p49 = scmp.eq.s32.totalorder %s18, 3
      %p50 = por %p48, %p49
      %p51 = scmp.ne.s32.totalorder %s40, %s41
      %p52 = scmp.eq.s32.totalorder %s18, 0
      %p53 = por %p51, %p52
      %p54 = scmp.ne.s32.totalorder %s40, %s41
      %p55 = scmp.eq.s32.totalorder %s19, 3
      %p56 = por %p54, %p55
      %p58 = scmp.ne.s32.totalorder %s41, %s57
      %p59 = scmp.eq.s32.totalorder %s19, 0
      %p60 = por %p58, %p59
      %s61 = sadd.s32 %s21, 1
      %s62 = smul.u32 %s61, 4
      %s63 = sadd.s32 %s28, 1
      %s64 = smul.u32 %s63, 4
      %s65 = ssub.s32 %s20, %s32
      %s66 = ssub.s32 %s62, %s64
      %s67 = sor.u32 %s65, %s66
      %p68 = scmp.eq.s32.totalorder %s67, 0
      %s70 = sadd.s32 %s69, 1
      %s71 = scalar_select %p68, %s69, %s70
      %p74 = pneg %p68
      %p75 = scmp.eq.s32.totalorder %s13, 3
      %p76 = por %p74, %p75
      %p77 = scmp.ne.s32.totalorder %s69, %s72
      %p78 = scmp.eq.s32.totalorder %s13, 0
      %p79 = por %p77, %p78
      %p80 = scmp.ne.s32.totalorder %s69, %s72
      %p81 = scmp.eq.s32.totalorder %s18, 3
      %p82 = por %p80, %p81
      %p83 = scmp.ne.s32.totalorder %s72, %s73
      %p84 = scmp.eq.s32.totalorder %s18, 0
      %p85 = por %p83, %p84
      %p86 = scmp.ne.s32.totalorder %s72, %s73
      %p87 = scmp.eq.s32.totalorder %s19, 3
      %p88 = por %p86, %p87
      %p90 = scmp.ne.s32.totalorder %s73, %s89
      %p91 = scmp.eq.s32.totalorder %s19, 0
      %p92 = por %p90, %p91
      %s94 = sadd.s32 %s93, 1
      %p97 = scmp.eq.s32.totalorder %s13, 3
      %p98 = scmp.ne.s32.totalorder %s93, %s95
      %p99 = scmp.eq.s32.totalorder %s13, 0
      %p100 = por %p98, %p99
      %p101 = scmp.ne.s32.totalorder %s93, %s95
      %p102 = scmp.eq.s32.totalorder %s18, 3
      %p103 = por %p101, %p102
      %p104 = scmp.ne.s32.totalorder %s95, %s96
      %p105 = scmp.eq.s32.totalorder %s18, 0
      %p106 = por %p104, %p105
      %p107 = scmp.ne.s32.totalorder %s95, %s96
      %p108 = scmp.eq.s32.totalorder %s19, 3
      %p109 = por %p107, %p108
      %p111 = scmp.ne.s32.totalorder %s96, %s110
      %p112 = scmp.eq.s32.totalorder %s19, 0
      %p113 = por %p111, %p112
      %s115 = sadd.s32 %s114, 1
      %p118 = scmp.eq.s32.totalorder %s13, 3
      %p119 = scmp.ne.s32.totalorder %s114, %s116
      %p120 = scmp.eq.s32.totalorder %s13, 0
      %p121 = por %p119, %p120
      %p122 = scmp.ne.s32.totalorder %s114, %s116
      %p123 = scmp.eq.s32.totalorder %s18, 3
      %p124 = por %p122, %p123
      %p125 = scmp.ne.s32.totalorder %s116, %s117
      %p126 = scmp.eq.s32.totalorder %s18, 0
      %p127 = por %p125, %p126
      %p128 = scmp.ne.s32.totalorder %s116, %s117
      %p129 = scmp.eq.s32.totalorder %s19, 3
      %p130 = por %p128, %p129
      %p132 = scmp.ne.s32.totalorder %s117, %s131
      %p133 = scmp.eq.s32.totalorder %s19, 0
      %p134 = por %p132, %p133
      %s135 = ssub.s32 %s20, %s32
      %s136 = ssub.s32 %s21, %s28
      %s137 = sor.u32 %s135, %s136
      %p138 = scmp.eq.s32.totalorder %s137, 0
      %s140 = sadd.s32 %s139, 1
      %s141 = scalar_select %p138, %s139, %s140
      %p144 = pneg %p138
      %p145 = scmp.eq.s32.totalorder %s13, 3
      %p146 = por %p144, %p145
      %p147 = scmp.ne.s32.totalorder %s139, %s142
      %p148 = scmp.eq.s32.totalorder %s13, 0
      %p149 = por %p147, %p148
      %p150 = scmp.ne.s32.totalorder %s139, %s142
      %p151 = scmp.eq.s32.totalorder %s18, 3
      %p152 = por %p150, %p151
      %p153 = scmp.ne.s32.totalorder %s142, %s143
      %p154 = scmp.eq.s32.totalorder %s18, 0
      %p155 = por %p153, %p154
      %p156 = scmp.ne.s32.totalorder %s142, %s143
      %p157 = scmp.eq.s32.totalorder %s19, 3
      %p158 = por %p156, %p157
      %p160 = scmp.ne.s32.totalorder %s143, %s159
      %p161 = scmp.eq.s32.totalorder %s19, 0
      %p162 = por %p160, %p161
      %p163 = scmp.le.s32.totalorder 1, %s13
      %p164 = scmp.lt.s32.totalorder %s13, 5
      %p165 = pnand %p163, %p164
      %p166 = pneg %p165
      // Predicated region
      $region9: #{upsampling_layer.1} parent=5 // pred_check
        _
      $region10: #{upsampling_layer.1} parent=5 // pred_check_branch
        %168 = sbr.rel (%p165) target = $region12
      $region11: #{upsampling_layer.1} parent=5 // pred_region
        %s169 = ssub.s32 %s13, 1
        // Predicated region
        $region13: #{upsampling_layer.1} parent=11 // pred_check
          %p170 = pneg %p106
        $region14: #{upsampling_layer.1} parent=11 // pred_check_branch
          %172 = sbr.rel (%p170) target = $region16
        $region15: #{upsampling_layer.1} parent=11 // pred_region
          _
        $region16: #{upsampling_layer.1} parent=11 // pred_fallthru
          _
        // Predicated region
        $region17: #{upsampling_layer.1} parent=11 // pred_check
          %p173 = pneg %p127
        $region18: #{upsampling_layer.1} parent=11 // pred_check_branch
          %175 = sbr.rel (%p173) target = $region20
        $region19: #{upsampling_layer.1} parent=11 // pred_region
          _
        $region20: #{upsampling_layer.1} parent=11 // pred_fallthru
          _
      $region12: #{upsampling_layer.1} parent=5 // pred_fallthru
        _
      %p176 = scmp.lt.s32.totalorder %s13, 4
      // Predicated region
      $region21: #{upsampling_layer.1} parent=5 // pred_check
        %p177 = pneg %p176
      $region22: #{upsampling_layer.1} parent=5 // pred_check_branch
        %179 = sbr.rel (%p177) target = $region24
      $region23: #{upsampling_layer.1} parent=5 // pred_region
        // Predicated region
        $region25: #{upsampling_layer.1} parent=23 // pred_check
          %p180 = pneg %p47
        $region26: #{upsampling_layer.1} parent=23 // pred_check_branch
          %182 = sbr.rel (%p180) target = $region28
        $region27: #{upsampling_layer.1} parent=23 // pred_region
          %s183 = smul.u32 4, %s21
          %s184 = ssub.s32 9, %s183
          %p185 = scmp.lt.s32.totalorder %s184, 4
          %s186 = scalar_select %p185, %s184, 4
          %s187 = smul.u32 64, %s186
          %p188 = scmp.lt.s32.totalorder %s20, 1
          %s189 = scalar_select %p188, %s20, 1
          %p190 = scmp.lt.s32.totalorder %s183, 8
          %s191 = scalar_select %p190, %s183, 8
          %s192 = smul.addr %s189, 9
          %s193 = sadd.s32 %s191, %s192
          %s194 = smul.addr %s193, 4
          %s195 = scalar_lea.vmem %s0, %s194
          %s196 = smul.u32 4, %s21
          %s197 = ssub.s32 9, %s196
          %p198 = scmp.lt.s32.totalorder %s197, 4
          %s199 = scalar_select %p198, %s197, 4
          %s200 = smul.u32 64, %s199
        $region28: #{upsampling_layer.1} parent=23 // pred_fallthru
          _
        // Predicated region
        $region29: #{upsampling_layer.1} parent=23 // pred_check
          %p201 = pneg %p79
        $region30: #{upsampling_layer.1} parent=23 // pred_check_branch
          %203 = sbr.rel (%p201) target = $region32
        $region31: #{upsampling_layer.1} parent=23 // pred_region
          %s204 = sadd.s32 %s21, 1
          %s205 = smul.u32 %s204, 4
          %p206 = scmp.lt.s32.totalorder %s20, 1
          %s207 = scalar_select %p206, %s20, 1
          %p208 = scmp.lt.s32.totalorder %s205, 8
          %s209 = scalar_select %p208, %s205, 8
          %s210 = smul.addr %s207, 9
          %s211 = sadd.s32 %s209, %s210
          %s212 = smul.addr %s211, 4
          %s213 = scalar_lea.vmem %s1, %s212
          %s214 = sadd.s32 %s21, 1
          %s215 = smul.u32 %s214, 4
        $region32: #{upsampling_layer.1} parent=23 // pred_fallthru
          _
      $region24: #{upsampling_layer.1} parent=5 // pred_fallthru
        _
      %p216 = scmp.le.s32.totalorder 1, %s13
      %p217 = scmp.lt.s32.totalorder %s13, 5
      %p218 = pnand %p216, %p217
      %p219 = pneg %p218
      // Predicated region
      $region33: #{upsampling_layer.1} parent=5 // pred_check
        _
      $region34: #{upsampling_layer.1} parent=5 // pred_check_branch
        %221 = sbr.rel (%p218) target = $region36
      $region35: #{upsampling_layer.1} parent=5 // pred_region
        %s222 = ssub.s32 %s13, 1
        %s223 = smul.u32 4, %s23
        %s224 = ssub.s32 9, %s223
        %p225 = scmp.lt.s32.totalorder %s224, 4
        %s226 = scalar_select %p225, %s224, 4
        %s227 = smul.u32 64, %s226
        %p228 = scmp.lt.s32.totalorder %s22, 1
        %s229 = scalar_select %p228, %s22, 1
        %p230 = scmp.lt.s32.totalorder %s223, 8
        %s231 = scalar_select %p230, %s223, 8
        %s232 = smul.addr %s229, 9
        %s233 = sadd.s32 %s231, %s232
        %s234 = smul.addr %s233, 4
        %s235 = scalar_lea.vmem %s0, %s234
        %p236 = pneg %p53
        %p237 = pneg %p50
        %s238 = sadd.s32 %s23, 1
        %s239 = smul.u32 %s238, 4
        %p240 = scmp.lt.s32.totalorder %s22, 1
        %s241 = scalar_select %p240, %s22, 1
        %p242 = scmp.lt.s32.totalorder %s239, 8
        %s243 = scalar_select %p242, %s239, 8
        %s244 = smul.addr %s241, 9
        %s245 = sadd.s32 %s243, %s244
        %s246 = smul.addr %s245, 4
        %s247 = scalar_lea.vmem %s1, %s246
        %p248 = pneg %p85
        %p249 = pneg %p82
        %p250 = pneg %p106
        %p251 = pneg %p103
        %p252 = pneg %p127
        %p253 = pneg %p124
        %p254 = pneg %p155
        %p255 = pneg %p152
        %s256 = sand.u32 %s142, 1
        %s257 = scalar_lea.sflag [#allocation3], %s256
        %s258 = sand.u32 %s142, 1
        %s259 = smul.addr %s258, 16
        %s260 = scalar_lea.vmem [#allocation2], %s259
        %s261 = smul.u32 4, %s23
        %s262 = ssub.s32 9, %s261
        %p263 = scmp.lt.s32.totalorder %s262, 4
        %s264 = scalar_select %p263, %s262, 4
        %s265 = smul.u32 64, %s264
        %p266 = scmp.lt.s32.totalorder %s22, 1
        %s267 = scalar_select %p266, %s22, 1
        %p268 = scmp.lt.s32.totalorder %s261, 8
        %s269 = scalar_select %p268, %s261, 8
        %s270 = smul.addr %s267, 9
        %s271 = sadd.s32 %s269, %s270
        %s272 = smul.addr %s271, 4
        %s273 = scalar_lea.vmem %s0, %s272
        %s274 = smul.u32 4, %s23
        %s275 = ssub.s32 9, %s274
        %p276 = scmp.lt.s32.totalorder %s275, 4
        %s277 = scalar_select %p276, %s275, 4
        %s278 = smul.u32 64, %s277
        %s279 = sadd.s32 %s23, 1
        %s280 = smul.u32 %s279, 4
        %p281 = scmp.lt.s32.totalorder %s22, 1
        %s282 = scalar_select %p281, %s22, 1
        %p283 = scmp.lt.s32.totalorder %s280, 8
        %s284 = scalar_select %p283, %s280, 8
        %s285 = smul.addr %s282, 9
        %s286 = sadd.s32 %s284, %s285
        %s287 = smul.addr %s286, 4
        %s288 = scalar_lea.vmem %s1, %s287
        %s289 = sadd.s32 %s23, 1
        %s290 = smul.u32 %s289, 4
        %s291 = smul.u32 4, %s23
        %v293 = vld [vmem:[%s273] sm:$0xff]
        %v294 = vld [vmem:[%s273 + $0x8] sm:$0xff]
        %v297 = vcombine.high %v293, %v293
        %v298 = vcombine.high %v294, %v294
        %v301 = vpack.c.bf16 %v293, %v293
        %v302 = vpack.c.bf16 %v297, %v297
        %v303 = vpack.c.bf16 %v294, %v294
        %v304 = vpack.c.bf16 %v298, %v298
        %v305 = vld [vmem:[%s288] sm:$0xf]
        %v306 = vpack.c.bf16 %v305, %v305
        %v307 = vld [vmem:[%s2] sm:$0xf]
        %v308 = vld [vmem:[%s2 + $0x4] sm:$0xf]
        %v309 = vld [vmem:[%s2 + $0x8] sm:$0xf]
        %v310 = vld [vmem:[%s2 + $0xc] sm:$0xf]
        %v311 = vld [vmem:[%s2 + $0x10] sm:$0xf]
        %317 = vrot.lane.b32.xlu0 %v301, 127
        %v318 = vpop.permute.xlu0 %317
        %319 = vrot.lane.b32.xlu0 %v302, 127
        %v320 = vpop.permute.xlu0 %319
        %321 = vrot.lane.b32.xlu0 %v303, 127
        %v322 = vpop.permute.xlu0 %321
        %323 = vrot.lane.b32.xlu0 %v304, 127
        %v324 = vpop.permute.xlu0 %323
        %325 = vrot.lane.b32.xlu0 %v306, 127
        %v326 = vpop.permute.xlu0 %325
        %vm327 = vcmask 1039360
        %v328 = vsel %vm327, %v318, %v320
        %v329 = vsel %vm327, %v320, %v322
        %v330 = vsel %vm327, %v322, %v324
        %v331 = vsel %vm327, %v324, %v326
        %vm332 = vcmask 31744
        %v334 = vsel %vm332, %v308, 0
        %vm336 = vcmask 1041408
        %v338 = vsel %vm336, %v328, 0
        %v341 = vsel %vm336, %v329, 0
        %v344 = vsel %vm336, %v330, 0
        %v347 = vsel %vm336, %v331, 0
        %349 = vmatprep.subr.bf16.mxu0 %v341
        %350 = vmatpush1.bf16.msra.mxu0 %v338
        %351 = vmatprep.subr.bf16.mxu0 0
        %352 = vmatpush1.bf16.msra.mxu0 0
        %353 = vmatprep.subr.bf16.mxu0 0
        %354 = vmatpush1.bf16.msra.mxu0 0
        %355 = vmatprep.subr.bf16.mxu0 0
        %356 = vmatpush1.bf16.msra.mxu0 0
        %357 = vmatprep.subr.bf16.mxu0 0
        %358 = vmatpush1.bf16.msra.mxu0 0
        %359 = vmatprep.subr.bf16.mxu0 0
        %360 = vmatpush1.bf16.msra.mxu0 0
        %361 = vmatprep.subr.bf16.mxu0 0
        %362 = vmatpush1.bf16.msra.mxu0 0
        %363 = vmatprep.subr.bf16.mxu0 0
        %364 = vmatpush1.bf16.msra.mxu0 0
        %365 = vmatprep.subr.bf16.mxu0 0
        %366 = vmatpush1.bf16.msra.mxu0 0
        %367 = vmatprep.subr.bf16.mxu0 0
        %368 = vmatpush1.bf16.msra.mxu0 0
        %369 = vmatprep.subr.bf16.mxu0 0
        %370 = vmatpush1.bf16.msra.mxu0 0
        %371 = vmatprep.subr.bf16.mxu0 0
        %372 = vmatpush1.bf16.msra.mxu0 0
        %373 = vmatprep.subr.bf16.mxu0 0
        %374 = vmatpush1.bf16.msra.mxu0 0
        %375 = vmatprep.subr.bf16.mxu0 0
        %376 = vmatpush1.bf16.msra.mxu0 0
        %377 = vmatprep.subr.bf16.mxu0 0
        %378 = vmatpush1.bf16.msra.mxu0 0
        %379 = vmatprep.subr.bf16.mxu0 0
        %380 = vmatpush1.bf16.msra.mxu0 0
        %381 = vmatprep.mubr.bf16.mxu0 0
        %382 = vmatmul.mubr.bf16.gmra.mrb[0].mxu0 %v334
        %v383 = vpop.f32.mrb[0].mxu0
        %v384 = vadd.f32 0.0, %v383
        %v385 = vpop.f32.mrb[0].mxu0
        %v386 = vadd.f32 0.0, %v385
        %v387 = vpop.f32.mrb[0].mxu0
        %v388 = vpop.f32.mrb[0].mxu0
        %389 = vdwg.mxu0
        %390 = vmatprep.subr.bf16.mxu0 %v347
        %391 = vmatpush1.bf16.msra.mxu0 %v344
        %392 = vmatprep.subr.bf16.mxu0 0
        %393 = vmatpush1.bf16.msra.mxu0 0
        %394 = vmatprep.subr.bf16.mxu0 0
        %395 = vmatpush1.bf16.msra.mxu0 0
        %396 = vmatprep.subr.bf16.mxu0 0
        %397 = vmatpush1.bf16.msra.mxu0 0
        %398 = vmatprep.subr.bf16.mxu0 0
        %399 = vmatpush1.bf16.msra.mxu0 0
        %400 = vmatprep.subr.bf16.mxu0 0
        %401 = vmatpush1.bf16.msra.mxu0 0
        %402 = vmatprep.subr.bf16.mxu0 0
        %403 = vmatpush1.bf16.msra.mxu0 0
        %404 = vmatprep.subr.bf16.mxu0 0
        %405 = vmatpush1.bf16.msra.mxu0 0
        %406 = vmatprep.subr.bf16.mxu0 0
        %407 = vmatpush1.bf16.msra.mxu0 0
        %408 = vmatprep.subr.bf16.mxu0 0
        %409 = vmatpush1.bf16.msra.mxu0 0
        %410 = vmatprep.subr.bf16.mxu0 0
        %411 = vmatpush1.bf16.msra.mxu0 0
        %412 = vmatprep.subr.bf16.mxu0 0
        %413 = vmatpush1.bf16.msra.mxu0 0
        %414 = vmatprep.subr.bf16.mxu0 0
        %415 = vmatpush1.bf16.msra.mxu0 0
        %416 = vmatprep.subr.bf16.mxu0 0
        %417 = vmatpush1.bf16.msra.mxu0 0
        %418 = vmatprep.subr.bf16.mxu0 0
        %419 = vmatpush1.bf16.msra.mxu0 0
        %420 = vmatprep.subr.bf16.mxu0 0
        %421 = vmatpush1.bf16.msra.mxu0 0
        %422 = vmatprep.mubr.bf16.mxu0 0
        %423 = vmatmul.mubr.bf16.gmra.mrb[0].mxu0 %v334
        %v424 = vpop.f32.mrb[0].mxu0
        %v425 = vadd.f32 0.0, %v424
        %v426 = vpop.f32.mrb[0].mxu0
        %v427 = vadd.f32 0.0, %v426
        %v428 = vpop.f32.mrb[0].mxu0
        %v429 = vpop.f32.mrb[0].mxu0
        %430 = vdwg.mxu0
        %v432 = vsel %vm332, %v307, 0
        %v435 = vsel %vm336, %v301, 0
        %v438 = vsel %vm336, %v302, 0
        %v441 = vsel %vm336, %v303, 0
        %v444 = vsel %vm336, %v304, 0
        %446 = vmatprep.subr.bf16.mxu0 %v438
        %447 = vmatpush1.bf16.msra.mxu0 %v435
        %448 = vmatprep.subr.bf16.mxu0 0
        %449 = vmatpush1.bf16.msra.mxu0 0
        %450 = vmatprep.subr.bf16.mxu0 0
        %451 = vmatpush1.bf16.msra.mxu0 0
        %452 = vmatprep.subr.bf16.mxu0 0
        %453 = vmatpush1.bf16.msra.mxu0 0
        %454 = vmatprep.subr.bf16.mxu0 0
        %455 = vmatpush1.bf16.msra.mxu0 0
        %456 = vmatprep.subr.bf16.mxu0 0
        %457 = vmatpush1.bf16.msra.mxu0 0
        %458 = vmatprep.subr.bf16.mxu0 0
        %459 = vmatpush1.bf16.msra.mxu0 0
        %460 = vmatprep.subr.bf16.mxu0 0
        %461 = vmatpush1.bf16.msra.mxu0 0
        %462 = vmatprep.subr.bf16.mxu0 0
        %463 = vmatpush1.bf16.msra.mxu0 0
        %464 = vmatprep.subr.bf16.mxu0 0
        %465 = vmatpush1.bf16.msra.mxu0 0
        %466 = vmatprep.subr.bf16.mxu0 0
        %467 = vmatpush1.bf16.msra.mxu0 0
        %468 = vmatprep.subr.bf16.mxu0 0
        %469 = vmatpush1.bf16.msra.mxu0 0
        %470 = vmatprep.subr.bf16.mxu0 0
        %471 = vmatpush1.bf16.msra.mxu0 0
        %472 = vmatprep.subr.bf16.mxu0 0
        %473 = vmatpush1.bf16.msra.mxu0 0
        %474 = vmatprep.subr.bf16.mxu0 0
        %475 = vmatpush1.bf16.msra.mxu0 0
        %476 = vmatprep.subr.bf16.mxu0 0
        %477 = vmatpush1.bf16.msra.mxu0 0
        %478 = vmatprep.mubr.bf16.mxu0 0
        %479 = vmatmul.mubr.bf16.gmra.mrb[0].mxu0 %v432
        %v480 = vpop.f32.mrb[0].mxu0
        %v481 = vadd.f32 %v384, %v480
        %v482 = vpop.f32.mrb[0].mxu0
        %v483 = vadd.f32 %v386, %v482
        %v484 = vpop.f32.mrb[0].mxu0
        %v485 = vpop.f32.mrb[0].mxu0
        %486 = vdwg.mxu0
        %487 = vmatprep.subr.bf16.mxu0 %v444
        %488 = vmatpush1.bf16.msra.mxu0 %v441
        %489 = vmatprep.subr.bf16.mxu0 0
        %490 = vmatpush1.bf16.msra.mxu0 0
        %491 = vmatprep.subr.bf16.mxu0 0
        %492 = vmatpush1.bf16.msra.mxu0 0
        %493 = vmatprep.subr.bf16.mxu0 0
        %494 = vmatpush1.bf16.msra.mxu0 0
        %495 = vmatprep.subr.bf16.mxu0 0
        %496 = vmatpush1.bf16.msra.mxu0 0
        %497 = vmatprep.subr.bf16.mxu0 0
        %498 = vmatpush1.bf16.msra.mxu0 0
        %499 = vmatprep.subr.bf16.mxu0 0
        %500 = vmatpush1.bf16.msra.mxu0 0
        %501 = vmatprep.subr.bf16.mxu0 0
        %502 = vmatpush1.bf16.msra.mxu0 0
        %503 = vmatprep.subr.bf16.mxu0 0
        %504 = vmatpush1.bf16.msra.mxu0 0
        %505 = vmatprep.subr.bf16.mxu0 0
        %506 = vmatpush1.bf16.msra.mxu0 0
        %507 = vmatprep.subr.bf16.mxu0 0
        %508 = vmatpush1.bf16.msra.mxu0 0
        %509 = vmatprep.subr.bf16.mxu0 0
        %510 = vmatpush1.bf16.msra.mxu0 0
        %511 = vmatprep.subr.bf16.mxu0 0
        %512 = vmatpush1.bf16.msra.mxu0 0
        %513 = vmatprep.subr.bf16.mxu0 0
        %514 = vmatpush1.bf16.msra.mxu0 0
        %515 = vmatprep.subr.bf16.mxu0 0
        %516 = vmatpush1.bf16.msra.mxu0 0
        %517 = vmatprep.subr.bf16.mxu0 0
        %518 = vmatpush1.bf16.msra.mxu0 0
        %519 = vmatprep.mubr.bf16.mxu0 0
        %520 = vmatmul.mubr.bf16.gmra.mrb[0].mxu0 %v432
        %v521 = vpop.f32.mrb[0].mxu0
        %v522 = vadd.f32 %v425, %v521
        %v523 = vpop.f32.mrb[0].mxu0
        %v524 = vadd.f32 %v427, %v523
        %v525 = vpop.f32.mrb[0].mxu0
        %v526 = vpop.f32.mrb[0].mxu0
        %527 = vdwg.mxu0
        %528 = vrot.lane.b32.xlu0 %v301, 126
        %v529 = vpop.permute.xlu0 %528
        %530 = vrot.lane.b32.xlu0 %v302, 126
        %v531 = vpop.permute.xlu0 %530
        %532 = vrot.lane.b32.xlu0 %v303, 126
        %v533 = vpop.permute.xlu0 %532
        %534 = vrot.lane.b32.xlu0 %v304, 126
        %v535 = vpop.permute.xlu0 %534
        %536 = vrot.lane.b32.xlu0 %v306, 126
        %v537 = vpop.permute.xlu0 %536
        %vm538 = vcmask 1031168
        %v539 = vsel %vm538, %v529, %v531
        %v540 = vsel %vm538, %v531, %v533
        %v541 = vsel %vm538, %v533, %v535
        %v542 = vsel %vm538, %v535, %v537
        %v544 = vsel %vm332, %v309, 0
        %v547 = vsel %vm336, %v539, 0
        %v550 = vsel %vm336, %v540, 0
        %v553 = vsel %vm336, %v541, 0
        %v556 = vsel %vm336, %v542, 0
        %558 = vmatprep.subr.bf16.mxu0 %v550
        %559 = vmatpush1.bf16.msra.mxu0 %v547
        %560 = vmatprep.subr.bf16.mxu0 0
        %561 = vmatpush1.bf16.msra.mxu0 0
        %562 = vmatprep.subr.bf16.mxu0 0
        %563 = vmatpush1.bf16.msra.mxu0 0
        %564 = vmatprep.subr.bf16.mxu0 0
        %565 = vmatpush1.bf16.msra.mxu0 0
        %566 = vmatprep.subr.bf16.mxu0 0
        %567 = vmatpush1.bf16.msra.mxu0 0
        %568 = vmatprep.subr.bf16.mxu0 0
        %569 = vmatpush1.bf16.msra.mxu0 0
        %570 = vmatprep.subr.bf16.mxu0 0
        %571 = vmatpush1.bf16.msra.mxu0 0
        %572 = vmatprep.subr.bf16.mxu0 0
        %573 = vmatpush1.bf16.msra.mxu0 0
        %574 = vmatprep.subr.bf16.mxu0 0
        %575 = vmatpush1.bf16.msra.mxu0 0
        %576 = vmatprep.subr.bf16.mxu0 0
        %577 = vmatpush1.bf16.msra.mxu0 0
        %578 = vmatprep.subr.bf16.mxu0 0
        %579 = vmatpush1.bf16.msra.mxu0 0
        %580 = vmatprep.subr.bf16.mxu0 0
        %581 = vmatpush1.bf16.msra.mxu0 0
        %582 = vmatprep.subr.bf16.mxu0 0
        %583 = vmatpush1.bf16.msra.mxu0 0
        %584 = vmatprep.subr.bf16.mxu0 0
        %585 = vmatpush1.bf16.msra.mxu0 0
        %586 = vmatprep.subr.bf16.mxu0 0
        %587 = vmatpush1.bf16.msra.mxu0 0
        %588 = vmatprep.subr.bf16.mxu0 0
        %589 = vmatpush1.bf16.msra.mxu0 0
        %590 = vmatprep.mubr.bf16.mxu0 0
        %591 = vmatmul.mubr.bf16.gmra.mrb[0].mxu0 %v544
        %v592 = vpop.f32.mrb[0].mxu0
        %v593 = vadd.f32 0.0, %v592
        %v594 = vpop.f32.mrb[0].mxu0
        %v595 = vadd.f32 0.0, %v594
        %v596 = vpop.f32.mrb[0].mxu0
        %v597 = vpop.f32.mrb[0].mxu0
        %598 = vdwg.mxu0
        %599 = vmatprep.subr.bf16.mxu0 %v556
        %600 = vmatpush1.bf16.msra.mxu0 %v553
        %601 = vmatprep.subr.bf16.mxu0 0
        %602 = vmatpush1.bf16.msra.mxu0 0
        %603 = vmatprep.subr.bf16.mxu0 0
        %604 = vmatpush1.bf16.msra.mxu0 0
        %605 = vmatprep.subr.bf16.mxu0 0
        %606 = vmatpush1.bf16.msra.mxu0 0
        %607 = vmatprep.subr.bf16.mxu0 0
        %608 = vmatpush1.bf16.msra.mxu0 0
        %609 = vmatprep.subr.bf16.mxu0 0
        %610 = vmatpush1.bf16.msra.mxu0 0
        %611 = vmatprep.subr.bf16.mxu0 0
        %612 = vmatpush1.bf16.msra.mxu0 0
        %613 = vmatprep.subr.bf16.mxu0 0
        %614 = vmatpush1.bf16.msra.mxu0 0
        %615 = vmatprep.subr.bf16.mxu0 0
        %616 = vmatpush1.bf16.msra.mxu0 0
        %617 = vmatprep.subr.bf16.mxu0 0
        %618 = vmatpush1.bf16.msra.mxu0 0
        %619 = vmatprep.subr.bf16.mxu0 0
        %620 = vmatpush1.bf16.msra.mxu0 0
        %621 = vmatprep.subr.bf16.mxu0 0
        %622 = vmatpush1.bf16.msra.mxu0 0
        %623 = vmatprep.subr.bf16.mxu0 0
        %624 = vmatpush1.bf16.msra.mxu0 0
        %625 = vmatprep.subr.bf16.mxu0 0
        %626 = vmatpush1.bf16.msra.mxu0 0
        %627 = vmatprep.subr.bf16.mxu0 0
        %628 = vmatpush1.bf16.msra.mxu0 0
        %629 = vmatprep.subr.bf16.mxu0 0
        %630 = vmatpush1.bf16.msra.mxu0 0
        %631 = vmatprep.mubr.bf16.mxu0 0
        %632 = vmatmul.mubr.bf16.gmra.mrb[0].mxu0 %v544
        %v633 = vpop.f32.mrb[0].mxu0
        %v634 = vadd.f32 0.0, %v633
        %v635 = vpop.f32.mrb[0].mxu0
        %v636 = vadd.f32 0.0, %v635
        %v637 = vpop.f32.mrb[0].mxu0
        %v638 = vpop.f32.mrb[0].mxu0
        %639 = vdwg.mxu0
        %v640 = vadd.f32 %v481, %v593
        %v641 = vadd.f32 %v483, %v595
        %v642 = vadd.f32 %v522, %v634
        %v643 = vadd.f32 %v524, %v636
        %644 = vrot.lane.b32.xlu0 %v301, 125
        %v645 = vpop.permute.xlu0 %644
        %646 = vrot.lane.b32.xlu0 %v302, 125
        %v647 = vpop.permute.xlu0 %646
        %648 = vrot.lane.b32.xlu0 %v303, 125
        %v649 = vpop.permute.xlu0 %648
        %650 = vrot.lane.b32.xlu0 %v304, 125
        %v651 = vpop.permute.xlu0 %650
        %652 = vrot.lane.b32.xlu0 %v306, 125
        %v653 = vpop.permute.xlu0 %652
        %vm654 = vcmask 1022976
        %v655 = vsel %vm654, %v645, %v647
        %v656 = vsel %vm654, %v647, %v649
        %v657 = vsel %vm654, %v649, %v651
        %v658 = vsel %vm654, %v651, %v653
        %v660 = vsel %vm332, %v310, 0
        %v663 = vsel %vm336, %v655, 0
        %v666 = vsel %vm336, %v656, 0
        %v669 = vsel %vm336, %v657, 0
        %v672 = vsel %vm336, %v658, 0
        %674 = vmatprep.subr.bf16.mxu0 %v666
        %675 = vmatpush1.bf16.msra.mxu0 %v663
        %676 = vmatprep.subr.bf16.mxu0 0
        %677 = vmatpush1.bf16.msra.mxu0 0
        %678 = vmatprep.subr.bf16.mxu0 0
        %679 = vmatpush1.bf16.msra.mxu0 0
        %680 = vmatprep.subr.bf16.mxu0 0
        %681 = vmatpush1.bf16.msra.mxu0 0
        %682 = vmatprep.subr.bf16.mxu0 0
        %683 = vmatpush1.bf16.msra.mxu0 0
        %684 = vmatprep.subr.bf16.mxu0 0
        %685 = vmatpush1.bf16.msra.mxu0 0
        %686 = vmatprep.subr.bf16.mxu0 0
        %687 = vmatpush1.bf16.msra.mxu0 0
        %688 = vmatprep.subr.bf16.mxu0 0
        %689 = vmatpush1.bf16.msra.mxu0 0
        %690 = vmatprep.subr.bf16.mxu0 0
        %691 = vmatpush1.bf16.msra.mxu0 0
        %692 = vmatprep.subr.bf16.mxu0 0
        %693 = vmatpush1.bf16.msra.mxu0 0
        %694 = vmatprep.subr.bf16.mxu0 0
        %695 = vmatpush1.bf16.msra.mxu0 0
        %696 = vmatprep.subr.bf16.mxu0 0
        %697 = vmatpush1.bf16.msra.mxu0 0
        %698 = vmatprep.subr.bf16.mxu0 0
        %699 = vmatpush1.bf16.msra.mxu0 0
        %700 = vmatprep.subr.bf16.mxu0 0
        %701 = vmatpush1.bf16.msra.mxu0 0
        %702 = vmatprep.subr.bf16.mxu0 0
        %703 = vmatpush1.bf16.msra.mxu0 0
        %704 = vmatprep.subr.bf16.mxu0 0
        %705 = vmatpush1.bf16.msra.mxu0 0
        %706 = vmatprep.mubr.bf16.mxu0 0
        %707 = vmatmul.mubr.bf16.gmra.mrb[0].mxu0 %v660
        %v708 = vpop.f32.mrb[0].mxu0
        %v709 = vadd.f32 0.0, %v708
        %v710 = vpop.f32.mrb[0].mxu0
        %v711 = vadd.f32 0.0, %v710
        %v712 = vpop.f32.mrb[0].mxu0
        %v713 = vpop.f32.mrb[0].mxu0
        %714 = vdwg.mxu0
        %715 = vmatprep.subr.bf16.mxu0 %v672
        %716 = vmatpush1.bf16.msra.mxu0 %v669
        %717 = vmatprep.subr.bf16.mxu0 0
        %718 = vmatpush1.bf16.msra.mxu0 0
        %719 = vmatprep.subr.bf16.mxu0 0
        %720 = vmatpush1.bf16.msra.mxu0 0
        %721 = vmatprep.subr.bf16.mxu0 0
        %722 = vmatpush1.bf16.msra.mxu0 0
        %723 = vmatprep.subr.bf16.mxu0 0
        %724 = vmatpush1.bf16.msra.mxu0 0
        %725 = vmatprep.subr.bf16.mxu0 0
        %726 = vmatpush1.bf16.msra.mxu0 0
        %727 = vmatprep.subr.bf16.mxu0 0
        %728 = vmatpush1.bf16.msra.mxu0 0
        %729 = vmatprep.subr.bf16.mxu0 0
        %730 = vmatpush1.bf16.msra.mxu0 0
        %731 = vmatprep.subr.bf16.mxu0 0
        %732 = vmatpush1.bf16.msra.mxu0 0
        %733 = vmatprep.subr.bf16.mxu0 0
        %734 = vmatpush1.bf16.msra.mxu0 0
        %735 = vmatprep.subr.bf16.mxu0 0
        %736 = vmatpush1.bf16.msra.mxu0 0
        %737 = vmatprep.subr.bf16.mxu0 0
        %738 = vmatpush1.bf16.msra.mxu0 0
        %739 = vmatprep.subr.bf16.mxu0 0
        %740 = vmatpush1.bf16.msra.mxu0 0
        %741 = vmatprep.subr.bf16.mxu0 0
        %742 = vmatpush1.bf16.msra.mxu0 0
        %743 = vmatprep.subr.bf16.mxu0 0
        %744 = vmatpush1.bf16.msra.mxu0 0
        %745 = vmatprep.subr.bf16.mxu0 0
        %746 = vmatpush1.bf16.msra.mxu0 0
        %747 = vmatprep.mubr.bf16.mxu0 0
        %748 = vmatmul.mubr.bf16.gmra.mrb[0].mxu0 %v660
        %v749 = vpop.f32.mrb[0].mxu0
        %v750 = vadd.f32 0.0, %v749
        %v751 = vpop.f32.mrb[0].mxu0
        %v752 = vadd.f32 0.0, %v751
        %v753 = vpop.f32.mrb[0].mxu0
        %v754 = vpop.f32.mrb[0].mxu0
        %755 = vdwg.mxu0
        %v756 = vadd.f32 %v640, %v709
        %v757 = vadd.f32 %v641, %v711
        %v758 = vadd.f32 %v642, %v750
        %v759 = vadd.f32 %v643, %v752
        %760 = vrot.lane.b32.xlu0 %v301, 124
        %v761 = vpop.permute.xlu0 %760
        %762 = vrot.lane.b32.xlu0 %v302, 124
        %v763 = vpop.permute.xlu0 %762
        %764 = vrot.lane.b32.xlu0 %v303, 124
        %v765 = vpop.permute.xlu0 %764
        %766 = vrot.lane.b32.xlu0 %v304, 124
        %v767 = vpop.permute.xlu0 %766
        %768 = vrot.lane.b32.xlu0 %v306, 124
        %v769 = vpop.permute.xlu0 %768
        %vm770 = vcmask 1014784
        %v771 = vsel %vm770, %v761, %v763
        %v772 = vsel %vm770, %v763, %v765
        %v773 = vsel %vm770, %v765, %v767
        %v774 = vsel %vm770, %v767, %v769
        %v776 = vsel %vm332, %v311, 0
        %v779 = vsel %vm336, %v771, 0
        %v782 = vsel %vm336, %v772, 0
        %v785 = vsel %vm336, %v773, 0
        %v788 = vsel %vm336, %v774, 0
        %790 = vmatprep.subr.bf16.mxu0 %v782
        %791 = vmatpush1.bf16.msra.mxu0 %v779
        %792 = vmatprep.subr.bf16.mxu0 0
        %793 = vmatpush1.bf16.msra.mxu0 0
        %794 = vmatprep.subr.bf16.mxu0 0
        %795 = vmatpush1.bf16.msra.mxu0 0
        %796 = vmatprep.subr.bf16.mxu0 0
        %797 = vmatpush1.bf16.msra.mxu0 0
        %798 = vmatprep.subr.bf16.mxu0 0
        %799 = vmatpush1.bf16.msra.mxu0 0
        %800 = vmatprep.subr.bf16.mxu0 0
        %801 = vmatpush1.bf16.msra.mxu0 0
        %802 = vmatprep.subr.bf16.mxu0 0
        %803 = vmatpush1.bf16.msra.mxu0 0
        %804 = vmatprep.subr.bf16.mxu0 0
        %805 = vmatpush1.bf16.msra.mxu0 0
        %806 = vmatprep.subr.bf16.mxu0 0
        %807 = vmatpush1.bf16.msra.mxu0 0
        %808 = vmatprep.subr.bf16.mxu0 0
        %809 = vmatpush1.bf16.msra.mxu0 0
        %810 = vmatprep.subr.bf16.mxu0 0
        %811 = vmatpush1.bf16.msra.mxu0 0
        %812 = vmatprep.subr.bf16.mxu0 0
        %813 = vmatpush1.bf16.msra.mxu0 0
        %814 = vmatprep.subr.bf16.mxu0 0
        %815 = vmatpush1.bf16.msra.mxu0 0
        %816 = vmatprep.subr.bf16.mxu0 0
        %817 = vmatpush1.bf16.msra.mxu0 0
        %818 = vmatprep.subr.bf16.mxu0 0
        %819 = vmatpush1.bf16.msra.mxu0 0
        %820 = vmatprep.subr.bf16.mxu0 0
        %821 = vmatpush1.bf16.msra.mxu0 0
        %822 = vmatprep.mubr.bf16.mxu0 0
        %823 = vmatmul.mubr.bf16.gmra.mrb[0].mxu0 %v776
        %v824 = vpop.f32.mrb[0].mxu0
        %v825 = vadd.f32 0.0, %v824
        %v826 = vpop.f32.mrb[0].mxu0
        %v827 = vadd.f32 0.0, %v826
        %v828 = vpop.f32.mrb[0].mxu0
        %v829 = vpop.f32.mrb[0].mxu0
        %830 = vdwg.mxu0
        %831 = vmatprep.subr.bf16.mxu0 %v788
        %832 = vmatpush1.bf16.msra.mxu0 %v785
        %833 = vmatprep.subr.bf16.mxu0 0
        %834 = vmatpush1.bf16.msra.mxu0 0
        %835 = vmatprep.subr.bf16.mxu0 0
        %836 = vmatpush1.bf16.msra.mxu0 0
        %837 = vmatprep.subr.bf16.mxu0 0
        %838 = vmatpush1.bf16.msra.mxu0 0
        %839 = vmatprep.subr.bf16.mxu0 0
        %840 = vmatpush1.bf16.msra.mxu0 0
        %841 = vmatprep.subr.bf16.mxu0 0
        %842 = vmatpush1.bf16.msra.mxu0 0
        %843 = vmatprep.subr.bf16.mxu0 0
        %844 = vmatpush1.bf16.msra.mxu0 0
        %845 = vmatprep.subr.bf16.mxu0 0
        %846 = vmatpush1.bf16.msra.mxu0 0
        %847 = vmatprep.subr.bf16.mxu0 0
        %848 = vmatpush1.bf16.msra.mxu0 0
        %849 = vmatprep.subr.bf16.mxu0 0
        %850 = vmatpush1.bf16.msra.mxu0 0
        %851 = vmatprep.subr.bf16.mxu0 0
        %852 = vmatpush1.bf16.msra.mxu0 0
        %853 = vmatprep.subr.bf16.mxu0 0
        %854 = vmatpush1.bf16.msra.mxu0 0
        %855 = vmatprep.subr.bf16.mxu0 0
        %856 = vmatpush1.bf16.msra.mxu0 0
        %857 = vmatprep.subr.bf16.mxu0 0
        %858 = vmatpush1.bf16.msra.mxu0 0
        %859 = vmatprep.subr.bf16.mxu0 0
        %860 = vmatpush1.bf16.msra.mxu0 0
        %861 = vmatprep.subr.bf16.mxu0 0
        %862 = vmatpush1.bf16.msra.mxu0 0
        %863 = vmatprep.mubr.bf16.mxu0 0
        %864 = vmatmul.mubr.bf16.gmra.mrb[0].mxu0 %v776
        %v865 = vpop.f32.mrb[0].mxu0
        %v866 = vadd.f32 0.0, %v865
        %v867 = vpop.f32.mrb[0].mxu0
        %v868 = vadd.f32 0.0, %v867
        %v869 = vpop.f32.mrb[0].mxu0
        %v870 = vpop.f32.mrb[0].mxu0
        %871 = vdwg.mxu0
        %v872 = vadd.f32 %v756, %v825
        %v873 = vadd.f32 %v757, %v827
        %v874 = vadd.f32 %v758, %v866
        %v875 = vadd.f32 %v759, %v868
        %v876 = vld [vmem:[%s3] sm:$0xff]
        %878 = vset.pattern.permute.xlu0 0
        %879 = vperm.xlu0 %878, %v876
        %v880 = vpop.permute.xlu0 %879
        %v882 = vadd.f32 %v872, %v880
        %v883 = vadd.f32 %v873, %v880
        %v884 = vadd.f32 %v874, %v880
        %v885 = vadd.f32 %v875, %v880
        %vm886 = vcmp.ge.f32.partialorder %v882, 0.0
        %vm887 = vcmp.ge.f32.partialorder %v883, 0.0
        %vm888 = vcmp.ge.f32.partialorder %v884, 0.0
        %vm889 = vcmp.ge.f32.partialorder %v885, 0.0
        %v890 = vmul.f32 %v882, 0.1
        %v891 = vmul.f32 %v883, 0.1
        %v892 = vmul.f32 %v884, 0.1
        %v893 = vmul.f32 %v885, 0.1
        %v894 = vsel %vm886, %v882, %v890
        %v895 = vsel %vm887, %v883, %v891
        %v896 = vsel %vm888, %v884, %v892
        %v897 = vsel %vm889, %v885, %v893
        %v898 = vpack.c.bf16 %v894, %v894
        %v899 = vpack.c.bf16 %v895, %v895
        %v900 = vpack.c.bf16 %v896, %v896
        %v901 = vpack.c.bf16 %v897, %v897
        %v906 = vunpack.c.l.b16 %v898
        %v907 = vunpack.c.l.b16 %v899
        %v908 = vunpack.c.l.b16 %v900
        %v909 = vunpack.c.l.b16 %v901
        %v910 = vpack.c.b16 %v907, %v906
        %v911 = vpack.c.b16 %v909, %v908
        %914 = vst [vmem:[%s260] sm:$0xff] %v910
        %915 = vst [vmem:[%s260 + $0x8] sm:$0xff] %v911
        %s916 = sand.u32 %s142, 1
        %s917 = scalar_lea.sflag [#allocation3], %s916
        %s918 = sand.u32 %s142, 1
        %s919 = smul.addr %s918, 16
        %s920 = scalar_lea.vmem [#allocation2], %s919
        // Predicated region
        $region37: #{upsampling_layer.1} parent=35 // pred_check
          %p921 = pneg %p152
        $region38: #{upsampling_layer.1} parent=35 // pred_check_branch
          %923 = sbr.rel (%p921) target = $region40
        $region39: #{upsampling_layer.1} parent=35 // pred_region
          %s924 = smul.u32 4, %s23
          %s926 = ssub.s32 256, 256
          %927 = vsyncadd %s917, %s926
          %s928 = smul.addr %s22, 8
          %s929 = sadd.s32 %s924, %s928
          %s930 = smul.addr %s929, 64
          %s931 = scalar_lea.hbm %s4, %s930
          %s933 = sshll.u32 %s920, 4
          %s934 = int_to_ptr.vmem [resolvable:$true] %s933
          %936 = dma.vmem_to_hbm [thread:$0]  %s934, 256, %s931, %s917
        $region40: #{upsampling_layer.1} parent=35 // pred_fallthru
          _
      $region36: #{upsampling_layer.1} parent=5 // pred_fallthru
        _
      %p937 = scmp.le.s32.totalorder 2, %s13
      // Predicated region
      $region41: #{upsampling_layer.1} parent=5 // pred_check
        %p938 = pneg %p937
      $region42: #{upsampling_layer.1} parent=5 // pred_check_branch
        %940 = sbr.rel (%p938) target = $region44
      $region43: #{upsampling_layer.1} parent=5 // pred_region
        %s941 = ssub.s32 %s13, 2
        // Predicated region
        $region45: #{upsampling_layer.1} parent=43 // pred_check
          %p942 = pneg %p158
        $region46: #{upsampling_layer.1} parent=43 // pred_check_branch
          %944 = sbr.rel (%p942) target = $region48
        $region47: #{upsampling_layer.1} parent=43 // pred_region
          %s945 = sand.u32 %s143, 1
          %s946 = scalar_lea.sflag [#allocation3], %s945
          %s947 = sand.u32 %s143, 1
          %s948 = smul.addr %s947, 16
          %s949 = scalar_lea.vmem [#allocation2], %s948
          %950 = dma.done %s946, 256
        $region48: #{upsampling_layer.1} parent=43 // pred_fallthru
          _
      $region44: #{upsampling_layer.1} parent=5 // pred_fallthru
        _
    $region6: #{upsampling_layer.1} parent=1 // loop_footer
      %s17 = sadd.s32 1, %s13
    $region7: #{upsampling_layer.1} parent=1 // loop_footer_branch
      %12 = sbr.rel target = $region3
    $region8: #{upsampling_layer.1} parent=1 // loop_exit
      _
    %951 = vsyncpa [#allocation3], 1
    %s952 = scalar_lea.sflag [#allocation3], 1
    %953 = vsyncpa %s952, 1

</llo_original>
